<compile_context>
chip_gen: v7x
topology: tpu7x:2x2x1
jax: 0.10.0
libtpu: 0.0.40
codegen_flags: <defaults>
</compile_context>

<pallas_src>
import math

import jax
import jax.numpy as jnp
from jax.experimental import pallas as pl
from jax.experimental.pallas import tpu as pltpu


def mlp_kernel(x_ref, w1_ref, b1_ref, w2_ref, b2_ref, o_ref):
    # x_ref : [1, TB]       batch along lanes
    # w1_ref: [n_hid, 1]    layer1.weight (PyTorch layout, n_in == 1)
    # b1_ref: [n_hid, 1]
    # w2_ref: [n_hid, 1]    layer2.weight reshaped (n_out == 1)
    # b2_ref: [1, 1]
    # o_ref : [1, TB]       lane-dense output store
    tb = x_ref.shape[1]
    chunk = math.gcd(tb, 512)  # static strip size; tb is a multiple of 128

    w1 = w1_ref[...]           # [n_hid, 1]
    b1 = b1_ref[...]           # [n_hid, 1]
    w2 = w2_ref[...]           # [n_hid, 1]
    b2 = b2_ref[...]           # [1, 1]

    # Static Python strip-mining over lane chunks: keeps the [n_hid, chunk]
    # elementwise chain in vregs instead of materializing [n_hid, tb] slabs.
    for c0 in range(0, tb, chunk):
        x = x_ref[:, c0:c0 + chunk]                          # [1, chunk]
        h = w1 * x + b1                                      # VPU -> [n_hid, chunk]
        s = 0.5 * (jnp.tanh(0.5 * h) + 1.0)                  # sigmoid via 1 tanh (EUP)
        y = jnp.sum(s * w2, axis=0, keepdims=True) + b2      # XLU sublane reduce
        o_ref[:, c0:c0 + chunk] = y.astype(o_ref.dtype)      # lane-dense store


def network_forward(x, w1, b1, w2, b2, *, tb=2048):
    """Pallas equivalent of Network.forward for the sine experiment.

    x : [B, 1]            float32
    w1: [n_hid, 1]        PyTorch layer1.weight
    b1: [n_hid]           PyTorch layer1.bias
    w2: [1, n_hid]        PyTorch layer2.weight
    b2: [1]               PyTorch layer2.bias
    returns [B, 1]
    """
    B, n_in = x.shape
    assert n_in == 1, "kernel specialised for the n_in=1 sine experiment"
    n_hid = w1.shape[0]
    n_out = w2.shape[0]
    assert n_out == 1, "kernel specialised for the n_out=1 sine experiment"

    # Batch tile: lane-dense (multiple of 128), large so each grid step moves
    # enough bytes to amortize per-step pipeline overhead. Sweepable via tb.
    tb = max(128, min(int(tb), 8192))
    tb = ((tb + 127) // 128) * 128
    tb = min(tb, ((B + 127) // 128) * 128)   # don't tile past the batch
    num_blocks = pl.cdiv(B, tb)

    # Free metadata reshapes: put batch on the lane axis. No padding — the
    # ragged last tile is masked by Pallas boundary-block handling.
    x_lanes = x.reshape(1, B)
    w1c = w1.reshape(n_hid, 1)
    b1c = b1.reshape(n_hid, 1)
    w2c = w2.reshape(n_hid, 1)   # [1, n_hid] -> [n_hid, 1]: same flat order, free
    b2c = b2.reshape(1, 1)

    out = pl.pallas_call(
        mlp_kernel,
        out_shape=jax.ShapeDtypeStruct((1, B), x.dtype),
        grid_spec=pltpu.PrefetchScalarGridSpec(
            num_scalar_prefetch=0,
            grid=(num_blocks,),
            in_specs=[
                pl.BlockSpec((1, tb), lambda i: (0, i)),        # x: streamed per tile
                pl.BlockSpec((n_hid, 1), lambda i: (0, 0)),     # w1: VMEM-resident
                pl.BlockSpec((n_hid, 1), lambda i: (0, 0)),     # b1: VMEM-resident
                pl.BlockSpec((n_hid, 1), lambda i: (0, 0)),     # w2: VMEM-resident
                pl.BlockSpec((1, 1), lambda i: (0, 0)),         # b2: VMEM-resident
            ],
            out_specs=pl.BlockSpec((1, tb), lambda i: (0, i)),  # lane-dense store
        ),
        compiler_params=pltpu.CompilerParams(
            # Batch tiles are independent; lets v7x shard them across its 2 TCs.
            dimension_semantics=("parallel",),
        ),
    )(x_lanes, w1c, b1c, w2c, b2c)

    return out.reshape(B, 1)   # free metadata reshape, no extra HBM pass


if __name__ == "__main__":
    # Shapes implied by the sine-fitting experiment: n_in=1, n_hidden=32, n_out=1.
    batch, n_in, n_hidden, n_out = 200, 1, 32, 1

    key = jax.random.PRNGKey(0)
    kx, k1, kb1, k2, kb2 = jax.random.split(key, 5)

    x = jax.random.uniform(kx, (batch, n_in), jnp.float32, -jnp.pi, jnp.pi)
    # PyTorch-style uniform(-1/sqrt(fan_in), 1/sqrt(fan_in)) init, PyTorch layouts.
    lim1 = 1.0 / jnp.sqrt(jnp.float32(n_in))
    lim2 = 1.0 / jnp.sqrt(jnp.float32(n_hidden))
    w1 = jax.random.uniform(k1, (n_hidden, n_in), jnp.float32, -lim1, lim1)
    b1 = jax.random.uniform(kb1, (n_hidden,), jnp.float32, -lim1, lim1)
    w2 = jax.random.uniform(k2, (n_out, n_hidden), jnp.float32, -lim2, lim2)
    b2 = jax.random.uniform(kb2, (n_out,), jnp.float32, -lim2, lim2)

    out = network_forward(x, w1, b1, w2, b2, tb=2048)
    jax.block_until_ready(out)

    # Plain-JAX reference (PyTorch semantics: y = x @ W.T + b).
    ref = jnp.dot(jax.nn.sigmoid(jnp.dot(x, w1.T) + b1), w2.T) + b2
    assert out.shape == (batch, n_out)
    assert jnp.allclose(out, ref, atol=1e-5, rtol=1e-5)

    print("KERNEL_OK")
</pallas_src>

<mosaic_0001>
module attributes {stable_mosaic.version = 11 : i64} {
  func.func @mlp_kernel(%arg0: i32, %arg1: memref<1x256xf32, #tpu.memory_space<vmem>>, %arg2: memref<32x1xf32, #tpu.memory_space<vmem>>, %arg3: memref<32x1xf32, #tpu.memory_space<vmem>>, %arg4: memref<32x1xf32, #tpu.memory_space<vmem>>, %arg5: memref<1x1xf32, #tpu.memory_space<vmem>>, %arg6: memref<1x256xf32, #tpu.memory_space<vmem>>) attributes {dimension_semantics = [#tpu.dimension_semantics<parallel>], iteration_bounds = array<i64: 1>, scalar_prefetch = 0 : i64, scratch_operands = 0 : i64, tpu.core_type = #tpu.core_type<tc>, window_params = [{transform_indices = @transform_0, window_bounds = array<i64: 1, 256>}, {pipeline_mode = #tpu.pipeline_mode<synchronous>, transform_indices = @transform_1, window_bounds = array<i64: 32, 1>}, {pipeline_mode = #tpu.pipeline_mode<synchronous>, transform_indices = @transform_2, window_bounds = array<i64: 32, 1>}, {pipeline_mode = #tpu.pipeline_mode<synchronous>, transform_indices = @transform_3, window_bounds = array<i64: 32, 1>}, {pipeline_mode = #tpu.pipeline_mode<synchronous>, transform_indices = @transform_4, window_bounds = array<i64: 1, 1>}, {transform_indices = @transform_5, window_bounds = array<i64: 1, 256>}]} {
    %c0 = arith.constant 0 : index
    %c0_0 = arith.constant 0 : index
    %0 = vector.load %arg2[%c0, %c0_0] : memref<32x1xf32, #tpu.memory_space<vmem>>, vector<32x1xf32>
    %c0_1 = arith.constant 0 : index
    %c0_2 = arith.constant 0 : index
    %1 = vector.load %arg3[%c0_1, %c0_2] : memref<32x1xf32, #tpu.memory_space<vmem>>, vector<32x1xf32>
    %c0_3 = arith.constant 0 : index
    %c0_4 = arith.constant 0 : index
    %2 = vector.load %arg4[%c0_3, %c0_4] : memref<32x1xf32, #tpu.memory_space<vmem>>, vector<32x1xf32>
    %c0_5 = arith.constant 0 : index
    %c0_6 = arith.constant 0 : index
    %3 = vector.load %arg5[%c0_5, %c0_6] : memref<1x1xf32, #tpu.memory_space<vmem>>, vector<1x1xf32>
    %c0_7 = arith.constant 0 : index
    %c0_8 = arith.constant 0 : index
    %4 = vector.load %arg1[%c0_7, %c0_8] : memref<1x256xf32, #tpu.memory_space<vmem>>, vector<1x256xf32>
    %5 = vector.broadcast %0 : vector<32x1xf32> to vector<32x256xf32>
    %6 = vector.broadcast %4 : vector<1x256xf32> to vector<32x256xf32>
    %7 = arith.mulf %5, %6 : vector<32x256xf32>
    %8 = vector.broadcast %1 : vector<32x1xf32> to vector<32x256xf32>
    %9 = arith.addf %7, %8 : vector<32x256xf32>
    %cst = arith.constant 5.000000e-01 : f32
    %10 = vector.broadcast %cst : f32 to vector<32x256xf32>
    %11 = arith.mulf %10, %9 : vector<32x256xf32>
    %12 = math.tanh %11 : vector<32x256xf32>
    %cst_9 = arith.constant 1.000000e+00 : f32
    %13 = vector.broadcast %cst_9 : f32 to vector<32x256xf32>
    %14 = arith.addf %12, %13 : vector<32x256xf32>
    %cst_10 = arith.constant 5.000000e-01 : f32
    %15 = vector.broadcast %cst_10 : f32 to vector<32x256xf32>
    %16 = arith.mulf %15, %14 : vector<32x256xf32>
    %17 = vector.broadcast %2 : vector<32x1xf32> to vector<32x256xf32>
    %18 = arith.mulf %16, %17 : vector<32x256xf32>
    %cst_11 = arith.constant dense<0.000000e+00> : vector<256xf32>
    %19 = vector.multi_reduction <add>, %18, %cst_11 [0] : vector<32x256xf32> to vector<256xf32>
    %20 = vector.shape_cast %19 : vector<256xf32> to vector<1x256xf32>
    %21 = vector.broadcast %3 : vector<1x1xf32> to vector<1x256xf32>
    %22 = arith.addf %20, %21 : vector<1x256xf32>
    %c0_12 = arith.constant 0 : index
    %c0_13 = arith.constant 0 : index
    %23 = vector.load %arg6[%c0_12, %c0_13] : memref<1x256xf32, #tpu.memory_space<vmem>>, vector<1x256xf32>
    tpu.vector_store %arg6[%c0_12, %c0_13], %22 {strides = array<i32>} : memref<1x256xf32, #tpu.memory_space<vmem>>, vector<1x256xf32>,
    return
  }
  func.func @transform_0(%arg0: i32) -> (i32, i32) {
    %c0_i32 = arith.constant 0 : i32
    %c0_i32_0 = arith.constant 0 : i32
    return %c0_i32, %arg0 : i32, i32
  }
  func.func @transform_1(%arg0: i32) -> (i32, i32) {
    %c0_i32 = arith.constant 0 : i32
    %c0_i32_0 = arith.constant 0 : i32
    %c0_i32_1 = arith.constant 0 : i32
    return %c0_i32, %c0_i32_0 : i32, i32
  }
  func.func @transform_2(%arg0: i32) -> (i32, i32) {
    %c0_i32 = arith.constant 0 : i32
    %c0_i32_0 = arith.constant 0 : i32
    %c0_i32_1 = arith.constant 0 : i32
    return %c0_i32, %c0_i32_0 : i32, i32
  }
  func.func @transform_3(%arg0: i32) -> (i32, i32) {
    %c0_i32 = arith.constant 0 : i32
    %c0_i32_0 = arith.constant 0 : i32
    %c0_i32_1 = arith.constant 0 : i32
    return %c0_i32, %c0_i32_0 : i32, i32
  }
  func.func @transform_4(%arg0: i32) -> (i32, i32) {
    %c0_i32 = arith.constant 0 : i32
    %c0_i32_0 = arith.constant 0 : i32
    %c0_i32_1 = arith.constant 0 : i32
    return %c0_i32, %c0_i32_0 : i32, i32
  }
  func.func @transform_5(%arg0: i32) -> (i32, i32) {
    %c0_i32 = arith.constant 0 : i32
    %c0_i32_0 = arith.constant 0 : i32
    return %c0_i32, %arg0 : i32, i32
  }
}

</mosaic_0001>

<llo_original>
// kernel: tpu_custom_call.1
$region0: #{tpu_custom_call.1}
  #allocation0 [shape = 'u32[]', space=smem, size = 0x4, offset = 0x4, fixed_abs, tag = 'smem constant byte address 0x4 - core index']
  #allocation1 [shape = 'u32[144,128]{1,0:T(1,128)}', space=vmem, size = 0x12000, scoped, tag = 'internal scratch']
  #allocation2 [shape = 'f32[1,1]{1,0:T(1,128)S(1)}', space=vmem, size = 0x200, scoped, tag = 'scoped memory for tpu_custom_call.1']
  %s0 = inlined_call_operand.vmem [shape: f32[1,200], index: 0, kind: input, shape index: {}]
  %s1 = inlined_call_operand.vmem [shape: f32[32,1], index: 1, kind: input, shape index: {}]
  %s2 = inlined_call_operand.vmem [shape: f32[32,1], index: 2, kind: input, shape index: {}]
  %s3 = inlined_call_operand.vmem [shape: f32[32,1], index: 3, kind: input, shape index: {}]
  %s4 = inlined_call_operand.<no memory space> [shape: f32[1,1], index: 4, kind: input, shape index: {}]
  %s5 = inlined_call_operand.hbm [shape: f32[1,200], index: 5, kind: output, shape index: {}]
  %s6 = sld [smem:[#allocation0]]
  $region30: #{tpu_custom_call.1} parent=0
    _
  %s8 = ssub.s32 1, %s6
  %s9 = scalar_select 0, %s8, %s6
  %v10 = vstv %s4
  %11 = vst [vmem:[#allocation2] sm:$0x1] %v10
  $region1: #{tpu_custom_call.1} parent=0
    #allocation3 [shape = 'u8[1024]{0}', space=vmem, size = 0x400, scoped, tag = 'output window, operand 0, single buffered']
    #allocation4 [shape = 's32[1]{0}', space=sflag, size = 0x4, scoped, tag = 'scoped memory for tpu_custom_call.1']
    %12 = vsyncpa [#allocation4], 0
    // Predicated region
    $region2: #{tpu_custom_call.1} parent=1 // pred_check
      _
    $region3: #{tpu_custom_call.1} parent=1 // pred_check_branch
      %14 = sbr.rel (0) target = $region5
    $region4: #{tpu_custom_call.1} parent=1 // pred_region
      _
    $region5: #{tpu_custom_call.1} parent=1 // pred_fallthru
      _
    // Predicated region
    $region6: #{tpu_custom_call.1} parent=1 // pred_check
      _
    $region7: #{tpu_custom_call.1} parent=1 // pred_check_branch
      %16 = sbr.rel (0) target = $region9
    $region8: #{tpu_custom_call.1} parent=1 // pred_region
      _
    $region9: #{tpu_custom_call.1} parent=1 // pred_fallthru
      _
    // Predicated region
    $region10: #{tpu_custom_call.1} parent=1 // pred_check
      _
    $region11: #{tpu_custom_call.1} parent=1 // pred_check_branch
      %18 = sbr.rel (0) target = $region13
    $region12: #{tpu_custom_call.1} parent=1 // pred_region
      _
    $region13: #{tpu_custom_call.1} parent=1 // pred_fallthru
      _
    // Predicated region
    $region14: #{tpu_custom_call.1} parent=1 // pred_check
      _
    $region15: #{tpu_custom_call.1} parent=1 // pred_check_branch
      %20 = sbr.rel (0) target = $region17
    $region16: #{tpu_custom_call.1} parent=1 // pred_region
      _
    $region17: #{tpu_custom_call.1} parent=1 // pred_fallthru
      _
    // Predicated region
    $region18: #{tpu_custom_call.1} parent=1 // pred_check
      _
    $region19: #{tpu_custom_call.1} parent=1 // pred_check_branch
      %22 = sbr.rel (0) target = $region21
    $region20: #{tpu_custom_call.1} parent=1 // pred_region
      _
    $region21: #{tpu_custom_call.1} parent=1 // pred_fallthru
      _
    %v23 = vld [vmem:[%s1] sm:$0xff]
    %v24 = vld [vmem:[%s1 + $0x8] sm:$0xff]
    %v25 = vld [vmem:[%s1 + $0x10] sm:$0xff]
    %v26 = vld [vmem:[%s1 + $0x18] sm:$0xff]
    %v27 = vld [vmem:[%s2] sm:$0xff]
    %v28 = vld [vmem:[%s2 + $0x8] sm:$0xff]
    %v29 = vld [vmem:[%s2 + $0x10] sm:$0xff]
    %v30 = vld [vmem:[%s2 + $0x18] sm:$0xff]
    %v31 = vld [vmem:[%s3] sm:$0xff]
    %v32 = vld [vmem:[%s3 + $0x8] sm:$0xff]
    %v33 = vld [vmem:[%s3 + $0x10] sm:$0xff]
    %v34 = vld [vmem:[%s3 + $0x18] sm:$0xff]
    %v35 = vld [vmem:[#allocation2] sm:$0x1]
    %v36 = vld [vmem:[%s0] sm:$0x3]
    %38 = vset.pattern.permute.xlu0 0
    %39 = vperm.xlu0 %38, %v23
    %v40 = vpop.permute.xlu0 %39
    %43 = vset.pattern.permute.xlu0 0
    %44 = vperm.xlu0 %43, %v24
    %v45 = vpop.permute.xlu0 %44
    %48 = vset.pattern.permute.xlu0 0
    %49 = vperm.xlu0 %48, %v25
    %v50 = vpop.permute.xlu0 %49
    %53 = vset.pattern.permute.xlu0 0
    %54 = vperm.xlu0 %53, %v26
    %v55 = vpop.permute.xlu0 %54
    %v58 = vlaneseq
    %v59 = vshrl.u32 %v58, 7
    %v60 = vsub.s32 0, %v59
    %v61 = vrot.slane %v36, %v60
    %v62 = vlaneseq
    %v63 = vshrl.u32 %v62, 7
    %v64 = vsub.s32 1, %v63
    %v65 = vrot.slane %v36, %v64
    %v68 = vmul.f32 %v40, %v61
    %v69 = vmul.f32 %v40, %v65
    %v70 = vmul.f32 %v45, %v61
    %v71 = vmul.f32 %v45, %v65
    %v72 = vmul.f32 %v50, %v61
    %v73 = vmul.f32 %v50, %v65
    %v74 = vmul.f32 %v55, %v61
    %v75 = vmul.f32 %v55, %v65
    %77 = vset.pattern.permute.xlu0 0
    %78 = vperm.xlu0 %77, %v27
    %v79 = vpop.permute.xlu0 %78
    %82 = vset.pattern.permute.xlu0 0
    %83 = vperm.xlu0 %82, %v28
    %v84 = vpop.permute.xlu0 %83
    %87 = vset.pattern.permute.xlu0 0
    %88 = vperm.xlu0 %87, %v29
    %v89 = vpop.permute.xlu0 %88
    %92 = vset.pattern.permute.xlu0 0
    %93 = vperm.xlu0 %92, %v30
    %v94 = vpop.permute.xlu0 %93
    %v96 = vadd.f32 %v68, %v79
    %v97 = vadd.f32 %v69, %v79
    %v98 = vadd.f32 %v70, %v84
    %v99 = vadd.f32 %v71, %v84
    %v100 = vadd.f32 %v72, %v89
    %v101 = vadd.f32 %v73, %v89
    %v102 = vadd.f32 %v74, %v94
    %v103 = vadd.f32 %v75, %v94
    %v104 = vmul.f32 %v96, 0.5
    %v105 = vmul.f32 %v97, 0.5
    %v106 = vmul.f32 %v98, 0.5
    %v107 = vmul.f32 %v99, 0.5
    %v108 = vmul.f32 %v100, 0.5
    %v109 = vmul.f32 %v101, 0.5
    %v110 = vmul.f32 %v102, 0.5
    %v111 = vmul.f32 %v103, 0.5
    %v112 = vtanh.pop %v104
    %v113 = vtanh.pop %v105
    %v114 = vtanh.pop %v106
    %v115 = vtanh.pop %v107
    %v116 = vtanh.pop %v108
    %v117 = vtanh.pop %v109
    %v118 = vtanh.pop %v110
    %v119 = vtanh.pop %v111
    %v120 = vadd.f32 %v112, 1.0
    %v121 = vadd.f32 %v113, 1.0
    %v122 = vadd.f32 %v114, 1.0
    %v123 = vadd.f32 %v115, 1.0
    %v124 = vadd.f32 %v116, 1.0
    %v125 = vadd.f32 %v117, 1.0
    %v126 = vadd.f32 %v118, 1.0
    %v127 = vadd.f32 %v119, 1.0
    %v128 = vmul.f32 %v120, 0.5
    %v129 = vmul.f32 %v121, 0.5
    %v130 = vmul.f32 %v122, 0.5
    %v131 = vmul.f32 %v123, 0.5
    %v132 = vmul.f32 %v124, 0.5
    %v133 = vmul.f32 %v125, 0.5
    %v134 = vmul.f32 %v126, 0.5
    %v135 = vmul.f32 %v127, 0.5
    %137 = vset.pattern.permute.xlu0 0
    %138 = vperm.xlu0 %137, %v31
    %v139 = vpop.permute.xlu0 %138
    %142 = vset.pattern.permute.xlu0 0
    %143 = vperm.xlu0 %142, %v32
    %v144 = vpop.permute.xlu0 %143
    %147 = vset.pattern.permute.xlu0 0
    %148 = vperm.xlu0 %147, %v33
    %v149 = vpop.permute.xlu0 %148
    %152 = vset.pattern.permute.xlu0 0
    %153 = vperm.xlu0 %152, %v34
    %v154 = vpop.permute.xlu0 %153
    %v156 = vmul.f32 %v128, %v139
    %v157 = vmul.f32 %v129, %v139
    %v158 = vmul.f32 %v130, %v144
    %v159 = vmul.f32 %v131, %v144
    %v160 = vmul.f32 %v132, %v149
    %v161 = vmul.f32 %v133, %v149
    %v162 = vmul.f32 %v134, %v154
    %v163 = vmul.f32 %v135, %v154
    %v164 = vadd.f32 %v156, %v158
    %v165 = vadd.f32 %v164, %v160
    %v166 = vadd.f32 %v165, %v162
    %v167 = vrot.slane %v166, 4
    %v168 = vadd.f32 %v166, %v167
    %v169 = vrot.slane %v168, 2
    %v170 = vadd.f32 %v168, %v169
    %v171 = vrot.slane %v170, 1
    %v172 = vadd.f32 %v170, %v171
    %v173 = vadd.f32 %v157, %v159
    %v174 = vadd.f32 %v173, %v161
    %v175 = vadd.f32 %v174, %v163
    %v176 = vrot.slane %v175, 4
    %v177 = vadd.f32 %v175, %v176
    %v178 = vrot.slane %v177, 2
    %v179 = vadd.f32 %v177, %v178
    %v180 = vrot.slane %v179, 1
    %v181 = vadd.f32 %v179, %v180
    %183 = vset.pattern.permute.xlu0 0
    %184 = vperm.xlu0 %183, %v35
    %v185 = vpop.permute.xlu0 %184
    %v187 = vlaneseq
    %v188 = vshrl.u32 %v187, 7
    %v189 = vsub.s32 0, %v188
    %v190 = vrot.slane %v185, %v189
    %v191 = vadd.f32 %v172, %v190
    %v192 = vadd.f32 %v181, %v190
    %v195 = vcombine.low %v191, %v192
    %v197 = vunpack.c.l.s4 1966171168
    %v198 = vunpack.c.0.s8 %v197
    %v199 = vlaneseq
    %v200 = vshrl.u32 %v199, 7
    %v201 = vsub.s32 %v198, %v200
    %v202 = vrot.slane %v195, %v201
    %v204 = vunpack.c.l.s4 1966171168
    %v205 = vunpack.c.0.s8 %v204
    %v206 = vlaneseq
    %v207 = vshrl.u32 %v206, 7
    %v208 = vsub.s32 %v205, %v207
    %v209 = vrot.slane %v202, %v208
    %v211 = vlaneseq
    %vm212 = vcmp.ge.s32.totalorder %v211, 0
    %vm213 = vcmp.lt.s32.totalorder %v211, 256
    %vm214 = vmand %vm212, %vm213
    %215 = vst.msk [vmem:[#allocation3] sm:$0x3] %vm214, %v209
    // Predicated region
    $region22: #{tpu_custom_call.1} parent=1 // pred_check
      _
    $region23: #{tpu_custom_call.1} parent=1 // pred_check_branch
      %217 = sbr.rel (0) target = $region25
    $region24: #{tpu_custom_call.1} parent=1 // pred_region
      %s219 = ssub.s32 32, 32
      %220 = vsyncadd [#allocation4], %s219
      %s222 = sshll.u32 [#allocation3], 4
      %s223 = int_to_ptr.vmem [resolvable:$true] %s222
      %225 = dma.vmem_to_hbm [thread:$0]  %s223, 32, %s5, [#allocation4]
    $region25: #{tpu_custom_call.1} parent=1 // pred_fallthru
      _
    // Predicated region
    $region26: #{tpu_custom_call.1} parent=1 // pred_check
      _
    $region27: #{tpu_custom_call.1} parent=1 // pred_check_branch
      %227 = sbr.rel (0) target = $region29
    $region28: #{tpu_custom_call.1} parent=1 // pred_region
      %228 = dma.done [#allocation4], 32
    $region29: #{tpu_custom_call.1} parent=1 // pred_fallthru
      _
    %229 = vsyncpa [#allocation4], 1

</llo_original>
